<compile_context>
chip_gen: v5e
topology: v5e:2x2
jax: 0.10.0
libtpu: 0.0.40
codegen_flags: <defaults>
</compile_context>

<pallas_src>
import jax
import jax.numpy as jnp
from jax.experimental import pallas as pl
from jax.experimental.pallas import tpu as pltpu

COEFF = 0.1
LANE = 128
SUBLANE = 8
MAX_TILE_ROWS = 2048  # (2048, 128) f32 block = 1 MiB per buffer


def _rootlu_kernel(x_ref, o_ref):
    # Load in native dtype, compute in f32 (v5e VPU/EUP have no bf16 path).
    x = x_ref[...].astype(jnp.float32)
    mask = x > 0.0
    # relu(x) ** coeff computed as exp(coeff * log(x)) on the EUP; guard the
    # non-positive lanes so log never sees <= 0.  pow(0, 0.1) == 0.
    safe = jnp.where(mask, x, 1.0)
    y = jnp.where(mask, jnp.exp(COEFF * jnp.log(safe)), 0.0)
    o_ref[...] = y.astype(o_ref.dtype)


def rootlu(x: jax.Array) -> jax.Array:
    """Applies relu(x) ** COEFF elementwise via a Pallas TPU kernel."""
    orig_shape = x.shape
    orig_dtype = x.dtype

    total = x.size
    # Pad the flat length only up to a multiple of 8*128 so the 2D slab has a
    # lane-dense last dim and a sublane-aligned row count.  (No pad at all
    # when already aligned — avoids an extra HBM pass.)
    chunk = SUBLANE * LANE
    padded = ((total + chunk - 1) // chunk) * chunk
    flat = jnp.ravel(x)
    if padded != total:
        flat = jnp.pad(flat, (0, padded - total))

    rows = padded // LANE                 # multiple of 8
    tile = min(MAX_TILE_ROWS, rows)       # multiple of 8, <= rows
    slab = flat.reshape(rows, LANE)

    grid = (pl.cdiv(rows, tile),)
    out = pl.pallas_call(
        _rootlu_kernel,
        out_shape=jax.ShapeDtypeStruct((rows, LANE), orig_dtype),
        grid_spec=pltpu.PrefetchScalarGridSpec(
            num_scalar_prefetch=0,
            grid=grid,
            in_specs=[pl.BlockSpec((tile, LANE), lambda i: (i, 0))],
            out_specs=pl.BlockSpec((tile, LANE), lambda i: (i, 0)),
        ),
        compiler_params=pltpu.CompilerParams(
            dimension_semantics=("parallel",),
        ),
    )(slab)

    out_flat = out.reshape(-1)
    if padded != total:
        out_flat = out_flat[:total]
    return out_flat.reshape(orig_shape)


if __name__ == "__main__":
    key = jax.random.PRNGKey(0)
    # NCHW input like the PyTorch module: batch=2, channels=4, spatial=16x16
    x = jax.random.normal(key, (2, 4, 16, 16), dtype=jnp.float32)

    y = rootlu(x)
    jax.block_until_ready(y)

    # Reference check in plain JAX
    ref = jnp.where(x > 0, jnp.power(jnp.maximum(x, 0.0), COEFF), 0.0)
    assert y.shape == x.shape
    assert y.dtype == x.dtype
    assert jnp.allclose(y, ref, atol=1e-5, rtol=1e-5), "mismatch vs reference"

    print("KERNEL_OK")
</pallas_src>

<mosaic_0001>
module attributes {stable_mosaic.version = 11 : i64} {
  func.func @_rootlu_kernel(%arg0: i32, %arg1: memref<16x128xf32, #tpu.memory_space<vmem>>, %arg2: memref<16x128xf32, #tpu.memory_space<vmem>>) attributes {dimension_semantics = [#tpu.dimension_semantics<parallel>], iteration_bounds = array<i64: 1>, scalar_prefetch = 0 : i64, scratch_operands = 0 : i64, tpu.core_type = #tpu.core_type<tc>, window_params = [{transform_indices = @transform_0, window_bounds = array<i64: 16, 128>}, {transform_indices = @transform_1, window_bounds = array<i64: 16, 128>}]} {
    %c0 = arith.constant 0 : index
    %c0_0 = arith.constant 0 : index
    %0 = vector.load %arg1[%c0, %c0_0] : memref<16x128xf32, #tpu.memory_space<vmem>>, vector<16x128xf32>
    %cst = arith.constant 0.000000e+00 : f32
    %1 = vector.broadcast %cst : f32 to vector<16x128xf32>
    %2 = arith.cmpf ogt, %0, %1 : vector<16x128xf32>
    %cst_1 = arith.constant 1.000000e+00 : f32
    %3 = vector.broadcast %cst_1 : f32 to vector<16x128xf32>
    %4 = arith.select %2, %0, %3 : vector<16x128xi1>, vector<16x128xf32>
    %5 = math.log %4 : vector<16x128xf32>
    %cst_2 = arith.constant 1.000000e-01 : f32
    %6 = vector.broadcast %cst_2 : f32 to vector<16x128xf32>
    %7 = arith.mulf %6, %5 : vector<16x128xf32>
    %8 = math.exp %7 : vector<16x128xf32>
    %cst_3 = arith.constant 0.000000e+00 : f32
    %9 = vector.broadcast %cst_3 : f32 to vector<16x128xf32>
    %10 = arith.select %2, %8, %9 : vector<16x128xi1>, vector<16x128xf32>
    %c0_4 = arith.constant 0 : index
    %c0_5 = arith.constant 0 : index
    %11 = vector.load %arg2[%c0_4, %c0_5] : memref<16x128xf32, #tpu.memory_space<vmem>>, vector<16x128xf32>
    tpu.vector_store %arg2[%c0_4, %c0_5], %10 {strides = array<i32>} : memref<16x128xf32, #tpu.memory_space<vmem>>, vector<16x128xf32>,
    return
  }
  func.func @transform_0(%arg0: i32) -> (i32, i32) {
    %c0_i32 = arith.constant 0 : i32
    %c0_i32_0 = arith.constant 0 : i32
    return %arg0, %c0_i32 : i32, i32
  }
  func.func @transform_1(%arg0: i32) -> (i32, i32) {
    %c0_i32 = arith.constant 0 : i32
    %c0_i32_0 = arith.constant 0 : i32
    return %arg0, %c0_i32 : i32, i32
  }
}

</mosaic_0001>

<llo_original>
// kernel: tpu_custom_call.1
$region0: #{tpu_custom_call.1}
  #allocation0 [shape = 'u32[]', space=smem, size = 0x4, offset = 0x4, fixed_abs, tag = 'smem constant byte address 0x4 - core index']
  #allocation1 [shape = 'u32[72,128]{1,0:T(1,128)}', space=vmem, size = 0x9000, scoped, tag = 'internal scratch']
  %s0 = inlined_call_operand.hbm [shape: f32[16,128], index: 0, kind: input, shape index: {}]
  %s1 = inlined_call_operand.hbm [shape: f32[16,128], index: 1, kind: output, shape index: {}]
  %s2 = sld [smem:[#allocation0]]
  $region18: #{tpu_custom_call.1} parent=0
    _
  %s4 = ssub.s32 1, %s2
  %s5 = scalar_select 0, %s4, %s2
  $region1: #{tpu_custom_call.1} parent=0
    #allocation2 [shape = 'u8[8192]{0}', space=vmem, size = 0x2000, scoped, tag = 'input window, operand 0, single buffered']
    #allocation3 [shape = 's32[1]{0}', space=sflag, size = 0x4, scoped, tag = 'scoped memory for tpu_custom_call.1']
    #allocation4 [shape = 's32[1]{0}', space=sflag, size = 0x4, scoped, tag = 'scoped memory for tpu_custom_call.1']
    #allocation5 [shape = 'u8[8192]{0}', space=vmem, size = 0x2000, scoped, tag = 'output window, operand 0, single buffered']
    %6 = vsyncpa [#allocation3], 0
    %7 = vsyncpa [#allocation4], 0
    // Predicated region
    $region2: #{tpu_custom_call.1} parent=1 // pred_check
      _
    $region3: #{tpu_custom_call.1} parent=1 // pred_check_branch
      %9 = sbr.rel (0) target = $region5
    $region4: #{tpu_custom_call.1} parent=1 // pred_region
      %11 = vsyncadd [#allocation3], 0
      %s12 = sshll.u32 %s0, 4
      %s13 = int_to_ptr.hbm [resolvable:$true] %s12
      %s14 = sshll.u32 [#allocation2], 4
      %s15 = int_to_ptr.vmem [resolvable:$true] %s14
      %20 = dma.hbm_to_vmem [thread:$0]  %s13, 256, %s15, [#allocation3], 128, 128, 8
    $region5: #{tpu_custom_call.1} parent=1 // pred_fallthru
      _
    // Predicated region
    $region6: #{tpu_custom_call.1} parent=1 // pred_check
      _
    $region7: #{tpu_custom_call.1} parent=1 // pred_check_branch
      %22 = sbr.rel (0) target = $region9
    $region8: #{tpu_custom_call.1} parent=1 // pred_region
      %24 = dma.done [#allocation3], 256
    $region9: #{tpu_custom_call.1} parent=1 // pred_fallthru
      _
    %v25 = vld [vmem:[#allocation2] sm:$0xff]
    %v26 = vld [vmem:[#allocation2 + $0x8] sm:$0xff]
    %vm27 = vcmp.gt.f32.partialorder %v25, 0.0
    %vm28 = vcmp.gt.f32.partialorder %v26, 0.0
    %v29 = vsel %vm27, %v25, 1.0
    %v30 = vsel %vm28, %v26, 1.0
    %v31 = vlog2.pop %v29
    %v32 = vmul.f32 %v31, 0.6931472
    %v33 = vlog2.pop %v30
    %v34 = vmul.f32 %v33, 0.6931472
    %v35 = vmul.f32 %v32, 0.1
    %v36 = vmul.f32 %v34, 0.1
    %v37 = vmul.f32 %v35, 1.442695
    %v38 = vpow.pop %v37
    %v39 = vmul.f32 %v36, 1.442695
    %v40 = vpow.pop %v39
    %v41 = vsel %vm27, %v38, 0.0
    %v42 = vsel %vm28, %v40, 0.0
    %43 = vst [vmem:[#allocation5] sm:$0xff] %v41
    %44 = vst [vmem:[#allocation5 + $0x8] sm:$0xff] %v42
    // Predicated region
    $region10: #{tpu_custom_call.1} parent=1 // pred_check
      _
    $region11: #{tpu_custom_call.1} parent=1 // pred_check_branch
      %46 = sbr.rel (0) target = $region13
    $region12: #{tpu_custom_call.1} parent=1 // pred_region
      %48 = vsyncadd [#allocation4], 0
      %s49 = sshll.u32 [#allocation5], 4
      %s50 = int_to_ptr.vmem [resolvable:$true] %s49
      %s51 = sshll.u32 %s1, 4
      %s52 = int_to_ptr.hbm [resolvable:$true] %s51
      %57 = dma.vmem_to_hbm [thread:$0]  %s50, 256, %s52, [#allocation4], 128, 128, 8
    $region13: #{tpu_custom_call.1} parent=1 // pred_fallthru
      _
    // Predicated region
    $region14: #{tpu_custom_call.1} parent=1 // pred_check
      _
    $region15: #{tpu_custom_call.1} parent=1 // pred_check_branch
      %59 = sbr.rel (0) target = $region17
    $region16: #{tpu_custom_call.1} parent=1 // pred_region
      %61 = dma.done [#allocation4], 256
    $region17: #{tpu_custom_call.1} parent=1 // pred_fallthru
      _
    %62 = vsyncpa [#allocation3], 1
    %63 = vsyncpa [#allocation4], 1

</llo_original>
